<compile_context>
chip_gen: v5e
topology: v5e:2x2
jax: 0.10.0
libtpu: 0.0.40
codegen_flags: <defaults>
</compile_context>

<pallas_src>
import functools
import math

import jax
import jax.numpy as jnp
import numpy as np
from jax.experimental import pallas as pl
from jax.experimental.pallas import tpu as pltpu


# --------------------------------------------------------------------------
# parameter setup (matches torch ref_dft_matrix / BlockFFT.__init__, eval mode)
# --------------------------------------------------------------------------
def ref_dft_matrix(n, H=1):
    """(H, n, n, 2) real view of the n-point DFT matrix exp(-2j*pi*k*j/n)."""
    k = jnp.arange(n, dtype=jnp.float32)
    ang = -2.0 * jnp.pi * k[:, None] * k[None, :] / n
    mat = jnp.stack([jnp.cos(ang), jnp.sin(ang)], axis=-1)  # (n, n, 2)
    return jnp.broadcast_to(mat[None], (H, n, n, 2))


def init_block_fft_params(H=1, max_m=16, learn_additive=False, key=None):
    """BlockFFT.__init__ with learn_dft_matrices=True, eval mode (dropout folded
    out).  learn_additive=True stores the *effective* forward blocks
    ref_dft_matrix(n) + 0.01*randn (the MonarchConv config); False stores the
    pure DFT blocks."""
    powers = [2 ** (i + 1) for i in range(int(math.log2(max_m)))]
    if learn_additive and key is None:
        key = jax.random.PRNGKey(0)
    params = {}
    for n in powers:
        mat = ref_dft_matrix(n, H=H)
        if learn_additive:
            key, sub = jax.random.split(key)
            mat = mat + 0.01 * jax.random.normal(sub, (H, n, n, 2), dtype=jnp.float32)
        params[f"mat_{n}"] = mat
    return params


def _as_complex(p):
    # (H, n, n, 2) -> (n, n) complex64   (H == 1 in this module configuration)
    return (p[0, ..., 0] + 1j * p[0, ..., 1]).astype(jnp.complex64)


# --------------------------------------------------------------------------
# stage matrices (host side, traced under the caller's jit)
# --------------------------------------------------------------------------
def _stage_matrices_T(params, N, max_m, inverse, dtype):
    """Dense (N, N) complex stages of the single-level Cooley-Tukey
    factorization (twiddles folded into stage 1, digit-reversed output flatten
    baked into stage 2), conjugated for the inverse path, TRANSPOSED for the
    batch-rows-on-sublanes  x @ A^T  kernel form, packed as 4 real planes:
        [A1'^T.re, A1'^T.im, A2^T.re, A2^T.im]   -> (4, N, N)
    The inverse 1/N scale is NOT folded here; it is applied in f32 in-kernel."""
    m = max_m
    n = N // max_m
    Mm = _as_complex(params[f"mat_{m}"])
    Mn = _as_complex(params[f"mat_{n}"])

    # stage 1: n parallel m-point DFTs   A1[a*n+j, o*n+j'] = Mm[a,o] * d(j,j')
    A1 = jnp.kron(Mm, jnp.eye(n, dtype=jnp.complex64))
    # twiddle tw[a*n+j] = exp(-2j*pi*a*j/N), folded:  A1' = diag(tw) @ A1
    idx = np.arange(N)
    tw = np.exp(-2j * np.pi * (idx % n) * (idx // n) / N).astype(np.complex64)
    A1p = jnp.asarray(tw)[:, None] * A1
    # stage 2: m parallel n-point DFTs + digit-reversed output flatten
    #   A2[b*m+a, a'*n+j] = Mn[b,j] * d(a,a')
    rows = np.arange(N)
    cols = np.arange(N)
    bi = (rows // m)[:, None]
    ai = (rows % m)[:, None]
    aj = (cols // n)[None, :]
    jj = (cols % n)[None, :]
    A2 = Mn[bi, jj] * jnp.asarray((ai == aj).astype(np.float32))

    if inverse:  # 1/N * conj(fft(conj(x)))  (1/N applied in-kernel, in f32)
        A1p = jnp.conj(A1p)
        A2 = jnp.conj(A2)

    A1t = jnp.transpose(A1p)
    A2t = jnp.transpose(A2)
    return jnp.stack(
        [jnp.real(A1t), jnp.imag(A1t), jnp.real(A2t), jnp.imag(A2t)], axis=0
    ).astype(dtype)


# --------------------------------------------------------------------------
# tiling / compiler-parameter helpers
# --------------------------------------------------------------------------
def _round_up(x, mult):
    return ((x + mult - 1) // mult) * mult


def _pick_tile(rows, N, itemsize, *, cap=1024, budget=20 << 20):
    """Row (sublane) tile: multiple of 8, large enough to amortize per-step
    overhead, small enough that double-buffered streamed planes plus f32
    temporaries stay inside an explicit VMEM budget."""
    per_row = 2 * 5 * N * itemsize + 8 * N * 4
    r8 = _round_up(max(rows, 1), 8)
    t = min(cap, r8)
    while t > 8 and t * per_row > budget:
        t = max(8, _round_up(t // 2, 8))
    # prefer >= 2 grid steps along this axis so v7x can shard it over its 2 TCs
    if r8 >= 16 and t >= r8:
        t = _round_up((r8 + 1) // 2, 8)
    # re-balance so padding to a multiple of t adds < 8 rows per tile
    nt = -(-r8 // t)
    t = max(8, _round_up(-(-r8 // nt), 8))
    return t


def _mosaic_params(t, N, mats_bytes, dims):
    streamed = 2 * t * 5 * N * 4          # <=5 streamed planes/row, double-buffered
    temps = 8 * t * N * 4                 # f32 accumulators / temporaries headroom
    est = int(streamed + 2 * mats_bytes + temps + (4 << 20))
    limit = int(min(48 << 20, max(32 << 20, est)))
    return pltpu.CompilerParams(dimension_semantics=dims, vmem_limit_bytes=limit)


# --------------------------------------------------------------------------
# Pallas kernels.  Layout: batch rows on sublanes, FFT length N on lanes.
#   m_ref : (4, N, N) = [A1'^T.re, A1'^T.im, A2^T.re, A2^T.im]
# --------------------------------------------------------------------------
def _fft_c2c_kernel(m_ref, x_ref, o_ref, *, scale):
    """Complex -> complex block-FFT on a (t, N) row tile (general path)."""
    f32 = jnp.float32
    xr = x_ref[0]
    xi = x_ref[1]
    a1r, a1i, a2r, a2i = m_ref[0], m_ref[1], m_ref[2], m_ref[3]
    zr = (jnp.dot(xr, a1r, preferred_element_type=f32)
          - jnp.dot(xi, a1i, preferred_element_type=f32))
    zi = (jnp.dot(xr, a1i, preferred_element_type=f32)
          + jnp.dot(xi, a1r, preferred_element_type=f32))
    dt = a1r.dtype
    zr = zr.astype(dt)
    zi = zi.astype(dt)
    yr = (jnp.dot(zr, a2r, preferred_element_type=f32)
          - jnp.dot(zi, a2i, preferred_element_type=f32))
    yi = (jnp.dot(zr, a2i, preferred_element_type=f32)
          + jnp.dot(zi, a2r, preferred_element_type=f32))
    if scale != 1.0:  # inverse 1/N applied in f32 (not folded into bf16 mats)
        yr = yr * scale
        yi = yi * scale
    o_ref[0] = yr.astype(o_ref.dtype)
    o_ref[1] = yi.astype(o_ref.dtype)


def _fft_r2c_kernel(m_ref, x_ref, o_ref):
    """Real -> complex forward block-FFT on a (t, N) row tile (only 6 matmuls)."""
    f32 = jnp.float32
    x = x_ref[...]
    a1r, a1i, a2r, a2i = m_ref[0], m_ref[1], m_ref[2], m_ref[3]
    zr = jnp.dot(x, a1r, preferred_element_type=f32)
    zi = jnp.dot(x, a1i, preferred_element_type=f32)
    dt = a1r.dtype
    zr = zr.astype(dt)
    zi = zi.astype(dt)
    o_ref[0] = (jnp.dot(zr, a2r, preferred_element_type=f32)
                - jnp.dot(zi, a2i, preferred_element_type=f32)).astype(o_ref.dtype)
    o_ref[1] = (jnp.dot(zr, a2i, preferred_element_type=f32)
                + jnp.dot(zi, a2r, preferred_element_type=f32)).astype(o_ref.dtype)


def _mul_ifft_kernel(m_ref, k_ref, u_ref, o_ref, *, scale):
    """Fused spectral multiply (u_f * k_f on the VPU) + learnable inverse FFT,
    real part only (6 matmuls).  Tiles are (th, N) head-row blocks for one
    (channel, batch) pair; the k tile covers the same head rows."""
    f32 = jnp.float32
    kr = k_ref[0, 0]
    ki = k_ref[1, 0]
    ur = u_ref[0, 0]
    ui = u_ref[1, 0]
    pr = ur * kr - ui * ki
    pi = ur * ki + ui * kr
    a1r, a1i, a2r, a2i = m_ref[0], m_ref[1], m_ref[2], m_ref[3]
    zr = (jnp.dot(pr, a1r, preferred_element_type=f32)
          - jnp.dot(pi, a1i, preferred_element_type=f32))
    zi = (jnp.dot(pr, a1i, preferred_element_type=f32)
          + jnp.dot(pi, a1r, preferred_element_type=f32))
    dt = a1r.dtype
    zr = zr.astype(dt)
    zi = zi.astype(dt)
    yr = (jnp.dot(zr, a2r, preferred_element_type=f32)
          - jnp.dot(zi, a2i, preferred_element_type=f32))
    o_ref[0, 0] = (yr * scale).astype(o_ref.dtype)


# --------------------------------------------------------------------------
# pallas_call wrappers
# --------------------------------------------------------------------------
def _call_c2c(mats, xs, *, t, scale):
    _, R, N = xs.shape
    mats_bytes = mats.size * mats.dtype.itemsize
    return pl.pallas_call(
        functools.partial(_fft_c2c_kernel, scale=scale),
        grid=(R // t,),
        in_specs=[
            pl.BlockSpec((4, N, N), lambda i: (0, 0, 0)),   # resident stage matrices
            pl.BlockSpec((2, t, N), lambda i: (0, i, 0)),   # streamed planar re/im
        ],
        out_specs=pl.BlockSpec((2, t, N), lambda i: (0, i, 0)),
        out_shape=jax.ShapeDtypeStruct((2, R, N), jnp.float32),
        compiler_params=_mosaic_params(t, N, mats_bytes, ("parallel",)),
    )(mats, xs)


def _call_r2c(mats, x, *, t, out_dtype):
    R, N = x.shape
    mats_bytes = mats.size * mats.dtype.itemsize
    return pl.pallas_call(
        _fft_r2c_kernel,
        grid=(R // t,),
        in_specs=[
            pl.BlockSpec((4, N, N), lambda i: (0, 0, 0)),
            pl.BlockSpec((t, N), lambda i: (i, 0)),         # streamed real rows
        ],
        out_specs=pl.BlockSpec((2, t, N), lambda i: (0, i, 0)),
        out_shape=jax.ShapeDtypeStruct((2, R, N), out_dtype),
        compiler_params=_mosaic_params(t, N, mats_bytes, ("parallel",)),
    )(mats, x)


def _call_mul_ifft(mats, k_f, u_f, *, th, scale, out_dtype):
    _, C, Hp, N = k_f.shape
    B = u_f.shape[1]
    mats_bytes = mats.size * mats.dtype.itemsize
    # Grid order (C, head-tiles, B): B is fastest so the k_f block index is
    # unchanged across consecutive steps (fetched once per (c, head-tile)).
    return pl.pallas_call(
        functools.partial(_mul_ifft_kernel, scale=scale),
        grid=(C, Hp // th, B),
        in_specs=[
            pl.BlockSpec((4, N, N), lambda c, h, b: (0, 0, 0)),
            pl.BlockSpec((2, 1, th, N), lambda c, h, b: (0, c, h, 0)),  # k_f
            pl.BlockSpec((2, 1, th, N), lambda c, h, b: (0, b, h, 0)),  # u_f
        ],
        out_specs=pl.BlockSpec((1, 1, th, N), lambda c, h, b: (c, b, h, 0)),
        out_shape=jax.ShapeDtypeStruct((C, B, Hp, N), out_dtype),
        compiler_params=_mosaic_params(
            th, N, mats_bytes, ("parallel", "parallel", "parallel")),
    )(mats, k_f, u_f)


# --------------------------------------------------------------------------
# block_fft / BlockFFT.forward equivalents (general complex path)
# --------------------------------------------------------------------------
def _block_fft_apply(x, params, *, N, forward, max_m, use_bf16):
    if not math.log2(N).is_integer():
        N = int(2 ** math.ceil(math.log2(N)))
    L = x.shape[-1]
    if L != N:
        x = jnp.pad(x, [(0, 0)] * (x.ndim - 1) + [(0, N - L)])
    # TODO(synk): only the single-level Cooley-Tukey case (max_m < N <= max_m**2)
    # is implemented; the recursive branch for N > max_m**2 is not.
    assert max_m < N <= max_m * max_m, "N must satisfy max_m < N <= max_m**2"

    dt = jnp.bfloat16 if use_bf16 else jnp.float32
    mats = _stage_matrices_T(params, N, max_m, inverse=not forward, dtype=dt)

    batch_shape = x.shape[:-1]
    R = int(np.prod(batch_shape)) if batch_shape else 1
    t = _pick_tile(R, N, 4)
    Rp = _round_up(R, t)
    # planar split re/im, batch rows on sublanes, N on lanes (no transposes)
    xs = jnp.stack([jnp.real(x).reshape(R, N), jnp.imag(x).reshape(R, N)],
                   axis=0).astype(dt)                       # (2, R, N)
    if Rp != R:
        xs = jnp.pad(xs, ((0, 0), (0, Rp - R), (0, 0)))
    out = _call_c2c(mats, xs, t=t, scale=1.0 if forward else 1.0 / N)
    res = (out[0, :R] + 1j * out[1, :R]).astype(jnp.complex64)
    return res.reshape(*batch_shape, N)


@functools.partial(jax.jit, static_argnames=("N", "forward", "max_m", "use_bf16"))
def block_fft_forward(x, params, *, N, forward=True, max_m=16, use_bf16=True):
    """BlockFFT.forward: FFT (forward=True) or learnable iFFT (forward=False)."""
    return _block_fft_apply(x, params, N=N, forward=forward, max_m=max_m,
                            use_bf16=use_bf16)


# --------------------------------------------------------------------------
# MonarchConv.forward (eval mode) built on the Pallas block-FFT kernels
# --------------------------------------------------------------------------
def init_monarch_conv_params(key, H, L, channels=1, max_m=32, learn_additive=True):
    kk, kfu, kfk = jax.random.split(key, 3)
    return {
        # LongConvKernel(weight_init='random'): kernel_params = 0.002*randn(C,H,L)
        "kernel_params": 0.002 * jax.random.normal(
            kk, (channels, H, L), dtype=jnp.float32),
        "fft_u": init_block_fft_params(H=1, max_m=max_m,
                                       learn_additive=learn_additive, key=kfu),
        "fft_k": init_block_fft_params(H=1, max_m=max_m,
                                       learn_additive=learn_additive, key=kfk),
    }


@functools.partial(jax.jit, static_argnames=("L", "max_m", "lam", "use_bf16"))
def monarch_conv_forward(u, params, *, L, max_m=32, lam=0.003, use_bf16=True):
    """MonarchConv.forward (causal, unidirectional, learn_ifft=True, eval mode;
    kernel/forward/fft dropouts are identities; self.D is unused by the
    reference forward)."""
    N = 2 * L
    assert max_m < N <= max_m * max_m, "N=2L must satisfy max_m < N <= max_m**2"
    dt = jnp.bfloat16 if use_bf16 else jnp.float32
    B, H, Lu = u.shape
    C = params["kernel_params"].shape[0]

    # LongConvKernel.forward: prox-thresholded random kernel (eval mode)
    k = params["kernel_params"]                                    # (C, H, L)
    k = jnp.maximum(jnp.abs(k) - lam, 0.0) * jnp.sign(k)

    th = _pick_tile(H, N, 2 if use_bf16 else 4)
    Hp = _round_up(H, th)

    # pad length -> N = 2L, heads -> Hp; cast to compute dtype (planar real input)
    u_p = jnp.pad(u.astype(dt), ((0, 0), (0, Hp - H), (0, N - Lu)))  # (B, Hp, N)
    k_p = jnp.pad(k.astype(dt), ((0, 0), (0, Hp - H), (0, N - k.shape[-1])))

    mats_k = _stage_matrices_T(params["fft_k"], N, max_m, inverse=False, dtype=dt)
    mats_u = _stage_matrices_T(params["fft_u"], N, max_m, inverse=False, dtype=dt)
    mats_i = _stage_matrices_T(params["fft_u"], N, max_m, inverse=True, dtype=dt)

    # forward block-FFTs (real input -> planar re/im output in compute dtype)
    k_f = _call_r2c(mats_k, k_p.reshape(C * Hp, N), t=th, out_dtype=dt)
    k_f = k_f.reshape(2, C, Hp, N)
    u_f = _call_r2c(mats_u, u_p.reshape(B * Hp, N), t=th, out_dtype=dt)
    u_f = u_f.reshape(2, B, Hp, N)

    # fused spectral multiply + learnable inverse FFT (real part only)
    y = _call_mul_ifft(mats_i, k_f, u_f, th=th, scale=1.0 / N, out_dtype=dt)

    y = y[:, :, :H, :L].astype(jnp.float32)                        # (C, B, H, L)
    y = jnp.transpose(y, (1, 0, 2, 3)).reshape(B, C * H, L)        # '(c h) l'
    return jax.nn.gelu(y, approximate=False)                       # nn.GELU()


# --------------------------------------------------------------------------
if __name__ == "__main__":
    key = jax.random.PRNGKey(0)
    k1, k2, k3, k4 = jax.random.split(key, 4)

    # ---------------- BlockFFT kernel checks (ref-DFT init => ordinary FFT) ----
    B, Cc, L, N = 2, 4, 60, 64
    xr = jax.random.normal(k1, (B, Cc, L), dtype=jnp.float32)
    xi = jax.random.normal(k2, (B, Cc, L), dtype=jnp.float32)
    x = (xr + 1j * xi).astype(jnp.complex64)
    fft_params = init_block_fft_params(H=1, max_m=16, learn_additive=False)

    x_pad = jnp.pad(x, ((0, 0), (0, 0), (0, N - L)))
    ref = jnp.fft.fft(x_pad, axis=-1)

    # full-precision path
    y32 = jax.block_until_ready(
        block_fft_forward(x, fft_params, N=N, forward=True, max_m=16,
                          use_bf16=False))
    np.testing.assert_allclose(np.asarray(y32), np.asarray(ref),
                               rtol=2e-2, atol=5e-2)

    # bf16 MXU fast path (default)
    y16 = jax.block_until_ready(
        block_fft_forward(x, fft_params, N=N, forward=True, max_m=16,
                          use_bf16=True))
    np.testing.assert_allclose(np.asarray(y16), np.asarray(ref),
                               rtol=1e-1, atol=7.5e-1)

    # inverse path (forward=False) round-trips to the padded input
    x_rec = jax.block_until_ready(
        block_fft_forward(y32, fft_params, N=N, forward=False, max_m=16,
                          use_bf16=False))
    np.testing.assert_allclose(np.asarray(x_rec), np.asarray(x_pad),
                               rtol=2e-2, atol=5e-2)

    # ---------------- MonarchConv forward (B=2, H=4, L=64, channels=1) --------
    H, Lc, Ch, MM = 4, 64, 1, 32
    u = jax.random.normal(k3, (B, H, Lc), dtype=jnp.float32)
    # learn_additive=False here so the output can be validated against jnp.fft;
    # the MonarchConv default (learn_additive=True) is supported via the flag.
    mc_params = init_monarch_conv_params(k4, H=H, L=Lc, channels=Ch,
                                         max_m=MM, learn_additive=False)
    y = jax.block_until_ready(
        monarch_conv_forward(u, mc_params, L=Lc, max_m=MM, lam=0.003,
                             use_bf16=False))

    kk = mc_params["kernel_params"]
    kprox = jnp.maximum(jnp.abs(kk) - 0.003, 0.0) * jnp.sign(kk)
    kf = jnp.fft.fft(kprox, n=2 * Lc, axis=-1)
    uf = jnp.fft.fft(u, n=2 * Lc, axis=-1)
    yf = jnp.einsum("bhl,chl->bchl", uf, kf)
    yre = jnp.real(jnp.fft.ifft(yf, axis=-1))[..., :Lc].reshape(B, Ch * H, Lc)
    y_ref = jax.nn.gelu(yre, approximate=False)
    np.testing.assert_allclose(np.asarray(y), np.asarray(y_ref),
                               rtol=5e-2, atol=2e-3)

    # bf16 fast path of the fused pipeline (default config): loose sanity check
    y16m = jax.block_until_ready(
        monarch_conv_forward(u, mc_params, L=Lc, max_m=MM, lam=0.003,
                             use_bf16=True))
    np.testing.assert_allclose(np.asarray(y16m), np.asarray(y_ref),
                               rtol=2e-1, atol=1e-2)

    print("KERNEL_OK")
</pallas_src>

<mosaic_0001>
module attributes {stable_mosaic.version = 11 : i64} {
  func.func @_fft_c2c_kernel(%arg0: i32, %arg1: memref<4x64x64xf32, #tpu.memory_space<vmem>>, %arg2: memref<2x8x64xf32, #tpu.memory_space<vmem>>, %arg3: memref<2x8x64xf32, #tpu.memory_space<vmem>>) attributes {dimension_semantics = [#tpu.dimension_semantics<parallel>], iteration_bounds = array<i64: 1>, scalar_prefetch = 0 : i64, scratch_operands = 0 : i64, tpu.core_type = #tpu.core_type<tc>, window_params = [{pipeline_mode = #tpu.pipeline_mode<synchronous>, transform_indices = @transform_0, window_bounds = array<i64: 4, 64, 64>}, {transform_indices = @transform_1, window_bounds = array<i64: 2, 8, 64>}, {transform_indices = @transform_2, window_bounds = array<i64: 2, 8, 64>}]} {
    %c0 = arith.constant 0 : index
    %c0_0 = arith.constant 0 : index
    %c0_1 = arith.constant 0 : index
    %0 = vector.load %arg2[%c0, %c0_0, %c0_1] : memref<2x8x64xf32, #tpu.memory_space<vmem>>, vector<1x8x64xf32>
    %1 = vector.shape_cast %0 : vector<1x8x64xf32> to vector<8x64xf32>
    %c1 = arith.constant 1 : index
    %c0_2 = arith.constant 0 : index
    %c0_3 = arith.constant 0 : index
    %2 = vector.load %arg2[%c1, %c0_2, %c0_3] : memref<2x8x64xf32, #tpu.memory_space<vmem>>, vector<1x8x64xf32>
    %3 = vector.shape_cast %2 : vector<1x8x64xf32> to vector<8x64xf32>
    %c0_4 = arith.constant 0 : index
    %c0_5 = arith.constant 0 : index
    %c0_6 = arith.constant 0 : index
    %4 = vector.load %arg1[%c0_4, %c0_5, %c0_6] : memref<4x64x64xf32, #tpu.memory_space<vmem>>, vector<1x64x64xf32>
    %5 = vector.shape_cast %4 : vector<1x64x64xf32> to vector<64x64xf32>
    %c1_7 = arith.constant 1 : index
    %c0_8 = arith.constant 0 : index
    %c0_9 = arith.constant 0 : index
    %6 = vector.load %arg1[%c1_7, %c0_8, %c0_9] : memref<4x64x64xf32, #tpu.memory_space<vmem>>, vector<1x64x64xf32>
    %7 = vector.shape_cast %6 : vector<1x64x64xf32> to vector<64x64xf32>
    %c2 = arith.constant 2 : index
    %c0_10 = arith.constant 0 : index
    %c0_11 = arith.constant 0 : index
    %8 = vector.load %arg1[%c2, %c0_10, %c0_11] : memref<4x64x64xf32, #tpu.memory_space<vmem>>, vector<1x64x64xf32>
    %9 = vector.shape_cast %8 : vector<1x64x64xf32> to vector<64x64xf32>
    %c3 = arith.constant 3 : index
    %c0_12 = arith.constant 0 : index
    %c0_13 = arith.constant 0 : index
    %10 = vector.load %arg1[%c3, %c0_12, %c0_13] : memref<4x64x64xf32, #tpu.memory_space<vmem>>, vector<1x64x64xf32>
    %11 = vector.shape_cast %10 : vector<1x64x64xf32> to vector<64x64xf32>
    %cst = arith.constant dense<0.000000e+00> : vector<8x64xf32>
    %12 = tpu.matmul %1, %5, %cst {dimension_numbers = #tpu.dot_dimension_numbers<[1], [0], [0], [1], [0, 0, 1, 1], [], []>} : vector<8x64xf32>, vector<64x64xf32>, vector<8x64xf32> -> vector<8x64xf32>
    %cst_14 = arith.constant dense<0.000000e+00> : vector<8x64xf32>
    %13 = tpu.matmul %3, %7, %cst_14 {dimension_numbers = #tpu.dot_dimension_numbers<[1], [0], [0], [1], [0, 0, 1, 1], [], []>} : vector<8x64xf32>, vector<64x64xf32>, vector<8x64xf32> -> vector<8x64xf32>
    %14 = arith.subf %12, %13 : vector<8x64xf32>
    %cst_15 = arith.constant dense<0.000000e+00> : vector<8x64xf32>
    %15 = tpu.matmul %1, %7, %cst_15 {dimension_numbers = #tpu.dot_dimension_numbers<[1], [0], [0], [1], [0, 0, 1, 1], [], []>} : vector<8x64xf32>, vector<64x64xf32>, vector<8x64xf32> -> vector<8x64xf32>
    %cst_16 = arith.constant dense<0.000000e+00> : vector<8x64xf32>
    %16 = tpu.matmul %3, %5, %cst_16 {dimension_numbers = #tpu.dot_dimension_numbers<[1], [0], [0], [1], [0, 0, 1, 1], [], []>} : vector<8x64xf32>, vector<64x64xf32>, vector<8x64xf32> -> vector<8x64xf32>
    %17 = arith.addf %15, %16 : vector<8x64xf32>
    %cst_17 = arith.constant dense<0.000000e+00> : vector<8x64xf32>
    %18 = tpu.matmul %14, %9, %cst_17 {dimension_numbers = #tpu.dot_dimension_numbers<[1], [0], [0], [1], [0, 0, 1, 1], [], []>} : vector<8x64xf32>, vector<64x64xf32>, vector<8x64xf32> -> vector<8x64xf32>
    %cst_18 = arith.constant dense<0.000000e+00> : vector<8x64xf32>
    %19 = tpu.matmul %17, %11, %cst_18 {dimension_numbers = #tpu.dot_dimension_numbers<[1], [0], [0], [1], [0, 0, 1, 1], [], []>} : vector<8x64xf32>, vector<64x64xf32>, vector<8x64xf32> -> vector<8x64xf32>
    %20 = arith.subf %18, %19 : vector<8x64xf32>
    %cst_19 = arith.constant dense<0.000000e+00> : vector<8x64xf32>
    %21 = tpu.matmul %14, %11, %cst_19 {dimension_numbers = #tpu.dot_dimension_numbers<[1], [0], [0], [1], [0, 0, 1, 1], [], []>} : vector<8x64xf32>, vector<64x64xf32>, vector<8x64xf32> -> vector<8x64xf32>
    %cst_20 = arith.constant dense<0.000000e+00> : vector<8x64xf32>
    %22 = tpu.matmul %17, %9, %cst_20 {dimension_numbers = #tpu.dot_dimension_numbers<[1], [0], [0], [1], [0, 0, 1, 1], [], []>} : vector<8x64xf32>, vector<64x64xf32>, vector<8x64xf32> -> vector<8x64xf32>
    %23 = arith.addf %21, %22 : vector<8x64xf32>
    %c0_21 = arith.constant 0 : index
    %c0_22 = arith.constant 0 : index
    %c0_23 = arith.constant 0 : index
    %24 = vector.load %arg3[%c0_21, %c0_22, %c0_23] : memref<2x8x64xf32, #tpu.memory_space<vmem>>, vector<1x8x64xf32>
    %25 = vector.shape_cast %24 : vector<1x8x64xf32> to vector<8x64xf32>
    %26 = vector.shape_cast %20 : vector<8x64xf32> to vector<1x8x64xf32>
    tpu.vector_store %arg3[%c0_21, %c0_22, %c0_23], %26 {strides = array<i32>} : memref<2x8x64xf32, #tpu.memory_space<vmem>>, vector<1x8x64xf32>,
    %c1_24 = arith.constant 1 : index
    %c0_25 = arith.constant 0 : index
    %c0_26 = arith.constant 0 : index
    %27 = vector.load %arg3[%c1_24, %c0_25, %c0_26] : memref<2x8x64xf32, #tpu.memory_space<vmem>>, vector<1x8x64xf32>
    %28 = vector.shape_cast %27 : vector<1x8x64xf32> to vector<8x64xf32>
    %29 = vector.shape_cast %23 : vector<8x64xf32> to vector<1x8x64xf32>
    tpu.vector_store %arg3[%c1_24, %c0_25, %c0_26], %29 {strides = array<i32>} : memref<2x8x64xf32, #tpu.memory_space<vmem>>, vector<1x8x64xf32>,
    return
  }
  func.func @transform_0(%arg0: i32) -> (i32, i32, i32) {
    %c0_i32 = arith.constant 0 : i32
    %c0_i32_0 = arith.constant 0 : i32
    %c0_i32_1 = arith.constant 0 : i32
    %c0_i32_2 = arith.constant 0 : i32
    return %c0_i32, %c0_i32_0, %c0_i32_1 : i32, i32, i32
  }
  func.func @transform_1(%arg0: i32) -> (i32, i32, i32) {
    %c0_i32 = arith.constant 0 : i32
    %c0_i32_0 = arith.constant 0 : i32
    %c0_i32_1 = arith.constant 0 : i32
    return %c0_i32, %arg0, %c0_i32_0 : i32, i32, i32
  }
  func.func @transform_2(%arg0: i32) -> (i32, i32, i32) {
    %c0_i32 = arith.constant 0 : i32
    %c0_i32_0 = arith.constant 0 : i32
    %c0_i32_1 = arith.constant 0 : i32
    return %c0_i32, %arg0, %c0_i32_0 : i32, i32, i32
  }
}

</mosaic_0001>

<llo_original>
// kernel: custom-call
$region0: #{custom-call}
  %s0 = inlined_call_operand.hbm [shape: c64[2,4,60], index: 0, kind: input, shape index: {}]
  %s1 = inlined_call_operand.vmem [shape: f32[2,4,60], index: 1, kind: output, shape index: {}]
  $region1: #{custom-call} parent=0
    #allocation0 [shape = 's32[1]{0}', space=sflag, size = 0x4, scoped, tag = 'scoped memory for custom-call']
    %2 = vsyncpa [#allocation0], 0
    %s4 = sshll.u32 %s0, 4
    %s5 = int_to_ptr.hbm [resolvable:$true] %s4
    %s6 = sshll.u32 %s1, 4
    %s7 = int_to_ptr.vmem [resolvable:$true] %s6
    %9 = dma.hbm_to_vmem [thread:$0]  %s5, 128, %s7, [#allocation0]
    %11 = dma.done [#allocation0], 128
    %12 = vsyncpa [#allocation0], 1

// kernel: custom-call.1
$region0: #{custom-call.1}
  %s0 = inlined_call_operand.hbm [shape: c64[2,4,60], index: 0, kind: input, shape index: {}]
  %s1 = inlined_call_operand.vmem [shape: f32[2,4,60], index: 1, kind: output, shape index: {}]
  %s2 = scalar_lea.hbm %s0, 8
  $region1: #{custom-call.1} parent=0
    #allocation0 [shape = 's32[1]{0}', space=sflag, size = 0x4, scoped, tag = 'scoped memory for custom-call.1']
    %3 = vsyncpa [#allocation0], 0
    %s5 = sshll.u32 %s2, 4
    %s6 = int_to_ptr.hbm [resolvable:$true] %s5
    %s7 = sshll.u32 %s1, 4
    %s8 = int_to_ptr.vmem [resolvable:$true] %s7
    %10 = dma.hbm_to_vmem [thread:$0]  %s6, 128, %s8, [#allocation0]
    %12 = dma.done [#allocation0], 128
    %13 = vsyncpa [#allocation0], 1

// kernel: custom-call.2
$region0: #{custom-call.2}
  %s0 = inlined_call_operand.vmem [shape: f32[2,4,64], index: 0, kind: input, shape index: {}]
  %s1 = inlined_call_operand.vmem [shape: f32[2,4,64], index: 1, kind: input, shape index: {}]
  %s2 = inlined_call_operand.hbm [shape: c64[2,4,64], index: 2, kind: output, shape index: {}]
  %s3 = scalar_lea.hbm %s2, 8
  $region1: #{custom-call.2} parent=0
    #allocation0 [shape = 's32[1]{0}', space=sflag, size = 0x4, scoped, tag = 'scoped memory for custom-call.2']
    %4 = vsyncpa [#allocation0], 0
    %s6 = sshll.u32 %s0, 4
    %s7 = int_to_ptr.vmem [resolvable:$true] %s6
    %s8 = sshll.u32 %s2, 4
    %s9 = int_to_ptr.hbm [resolvable:$true] %s8
    %11 = dma.vmem_to_hbm [thread:$0]  %s7, 128, %s9, [#allocation0]
    %13 = dma.done [#allocation0], 128
    %14 = vsyncpa [#allocation0], 1
  $region2: #{custom-call.2} parent=0
    #allocation1 [shape = 's32[1]{0}', space=sflag, size = 0x4, scoped, tag = 'scoped memory for custom-call.2']
    %15 = vsyncpa [#allocation1], 0
    %s17 = sshll.u32 %s1, 4
    %s18 = int_to_ptr.vmem [resolvable:$true] %s17
    %s19 = sshll.u32 %s3, 4
    %s20 = int_to_ptr.hbm [resolvable:$true] %s19
    %22 = dma.vmem_to_hbm [thread:$0]  %s18, 128, %s20, [#allocation1]
    %24 = dma.done [#allocation1], 128
    %25 = vsyncpa [#allocation1], 1

// kernel: block_fft_forward.1
$region0: #{block_fft_forward.1}
  #allocation0 [shape = 'u32[]', space=smem, size = 0x4, offset = 0x4, fixed_abs, tag = 'smem constant byte address 0x4 - core index']
  #allocation1 [shape = 'u32[72,128]{1,0:T(1,128)}', space=vmem, size = 0x9000, scoped, tag = 'internal scratch']
  %s0 = inlined_call_operand.vmem [shape: f32[4,64,64], index: 0, kind: input, shape index: {}]
  %s1 = inlined_call_operand.vmem [shape: f32[2,8,64], index: 1, kind: input, shape index: {}]
  %s2 = inlined_call_operand.vmem [shape: f32[2,8,64], index: 2, kind: output, shape index: {}]
  %s3 = sld [smem:[#allocation0]]
  $region18: #{block_fft_forward.1} parent=0
    _
  %s5 = ssub.s32 1, %s3
  %s6 = scalar_select 0, %s5, %s3
  // Predicated region
  $region2: #{block_fft_forward.1} parent=0 // pred_check
    _
  $region3: #{block_fft_forward.1} parent=0 // pred_check_branch
    %8 = sbr.rel (0) target = $region5
  $region4: #{block_fft_forward.1} parent=0 // pred_region
    _
  $region5: #{block_fft_forward.1} parent=0 // pred_fallthru
    _
  // Predicated region
  $region6: #{block_fft_forward.1} parent=0 // pred_check
    _
  $region7: #{block_fft_forward.1} parent=0 // pred_check_branch
    %10 = sbr.rel (0) target = $region9
  $region8: #{block_fft_forward.1} parent=0 // pred_region
    _
  $region9: #{block_fft_forward.1} parent=0 // pred_fallthru
    _
  %v11 = vld [vmem:[%s1] sm:$0xff]
  %s12 = scalar_lea.vmem %s1, 8
  %v13 = vld [vmem:[%s12] sm:$0xff]
  %v14 = vld [vmem:[%s0] sm:$0xff]
  %v15 = vld [vmem:[%s0 + $0x8] sm:$0xff]
  %v16 = vld [vmem:[%s0 + $0x10] sm:$0xff]
  %v17 = vld [vmem:[%s0 + $0x18] sm:$0xff]
  %v18 = vld [vmem:[%s0 + $0x20] sm:$0xff]
  %v19 = vld [vmem:[%s0 + $0x28] sm:$0xff]
  %v20 = vld [vmem:[%s0 + $0x30] sm:$0xff]
  %v21 = vld [vmem:[%s0 + $0x38] sm:$0xff]
  %s22 = scalar_lea.vmem %s0, 64
  %v23 = vld [vmem:[%s22] sm:$0xff]
  %v24 = vld [vmem:[%s22 + $0x8] sm:$0xff]
  %v25 = vld [vmem:[%s22 + $0x10] sm:$0xff]
  %v26 = vld [vmem:[%s22 + $0x18] sm:$0xff]
  %v27 = vld [vmem:[%s22 + $0x20] sm:$0xff]
  %v28 = vld [vmem:[%s22 + $0x28] sm:$0xff]
  %v29 = vld [vmem:[%s22 + $0x30] sm:$0xff]
  %v30 = vld [vmem:[%s22 + $0x38] sm:$0xff]
  %s31 = scalar_lea.vmem %s0, 128
  %v32 = vld [vmem:[%s31] sm:$0xff]
  %v33 = vld [vmem:[%s31 + $0x8] sm:$0xff]
  %v34 = vld [vmem:[%s31 + $0x10] sm:$0xff]
  %v35 = vld [vmem:[%s31 + $0x18] sm:$0xff]
  %v36 = vld [vmem:[%s31 + $0x20] sm:$0xff]
  %v37 = vld [vmem:[%s31 + $0x28] sm:$0xff]
  %v38 = vld [vmem:[%s31 + $0x30] sm:$0xff]
  %v39 = vld [vmem:[%s31 + $0x38] sm:$0xff]
  %s40 = scalar_lea.vmem %s0, 192
  %v41 = vld [vmem:[%s40] sm:$0xff]
  %v42 = vld [vmem:[%s40 + $0x8] sm:$0xff]
  %v43 = vld [vmem:[%s40 + $0x10] sm:$0xff]
  %v44 = vld [vmem:[%s40 + $0x18] sm:$0xff]
  %v45 = vld [vmem:[%s40 + $0x20] sm:$0xff]
  %v46 = vld [vmem:[%s40 + $0x28] sm:$0xff]
  %v47 = vld [vmem:[%s40 + $0x30] sm:$0xff]
  %v48 = vld [vmem:[%s40 + $0x38] sm:$0xff]
  %vm49 = vcmask 523264
  %v51 = vsel %vm49, %v11, 0
  %53 = vmatpush.msra.mxu0 0.0
  %54 = vmatpush.msra.mxu0 0.0
  %55 = vmatpush.msra.mxu0 0.0
  %56 = vmatpush.msra.mxu0 0.0
  %57 = vmatpush.msra.mxu0 0.0
  %58 = vmatpush.msra.mxu0 0.0
  %59 = vmatpush.msra.mxu0 0.0
  %60 = vmatpush.msra.mxu0 0.0
  %61 = vmatpush.msra.mxu0 %v21
  %62 = vmatpush.msra.mxu0 %v20
  %63 = vmatpush.msra.mxu0 %v19
  %64 = vmatpush.msra.mxu0 %v18
  %65 = vmatpush.msra.mxu0 %v17
  %66 = vmatpush.msra.mxu0 %v16
  %67 = vmatpush.msra.mxu0 %v15
  %68 = vmatpush.msra.mxu0 %v14
  %69 = vmatmul.f32.gmra.mxu0 %v51
  %v70 = vpop.f32.mrf.mxu0
  %v71 = vadd.f32 0.0, %v70
  %72 = vdwg.mxu0
  %v74 = vsel %vm49, %v13, 0
  %76 = vmatpush.msra.mxu0 0.0
  %77 = vmatpush.msra.mxu0 0.0
  %78 = vmatpush.msra.mxu0 0.0
  %79 = vmatpush.msra.mxu0 0.0
  %80 = vmatpush.msra.mxu0 0.0
  %81 = vmatpush.msra.mxu0 0.0
  %82 = vmatpush.msra.mxu0 0.0
  %83 = vmatpush.msra.mxu0 0.0
  %84 = vmatpush.msra.mxu0 %v30
  %85 = vmatpush.msra.mxu0 %v29
  %86 = vmatpush.msra.mxu0 %v28
  %87 = vmatpush.msra.mxu0 %v27
  %88 = vmatpush.msra.mxu0 %v26
  %89 = vmatpush.msra.mxu0 %v25
  %90 = vmatpush.msra.mxu0 %v24
  %91 = vmatpush.msra.mxu0 %v23
  %92 = vmatmul.f32.gmra.mxu0 %v74
  %v93 = vpop.f32.mrf.mxu0
  %v94 = vadd.f32 0.0, %v93
  %95 = vdwg.mxu0
  %v96 = vsub.f32 %v71, %v94
  %97 = vmatpush.msra.mxu0 0.0
  %98 = vmatpush.msra.mxu0 0.0
  %99 = vmatpush.msra.mxu0 0.0
  %100 = vmatpush.msra.mxu0 0.0
  %101 = vmatpush.msra.mxu0 0.0
  %102 = vmatpush.msra.mxu0 0.0
  %103 = vmatpush.msra.mxu0 0.0
  %104 = vmatpush.msra.mxu0 0.0
  %105 = vmatpush.msra.mxu0 %v21
  %106 = vmatpush.msra.mxu0 %v20
  %107 = vmatpush.msra.mxu0 %v19
  %108 = vmatpush.msra.mxu0 %v18
  %109 = vmatpush.msra.mxu0 %v17
  %110 = vmatpush.msra.mxu0 %v16
  %111 = vmatpush.msra.mxu0 %v15
  %112 = vmatpush.msra.mxu0 %v14
  %113 = vmatmul.f32.gmra.mxu0 %v74
  %v114 = vpop.f32.mrf.mxu0
  %v115 = vadd.f32 0.0, %v114
  %116 = vdwg.mxu0
  %117 = vmatpush.msra.mxu0 0.0
  %118 = vmatpush.msra.mxu0 0.0
  %119 = vmatpush.msra.mxu0 0.0
  %120 = vmatpush.msra.mxu0 0.0
  %121 = vmatpush.msra.mxu0 0.0
  %122 = vmatpush.msra.mxu0 0.0
  %123 = vmatpush.msra.mxu0 0.0
  %124 = vmatpush.msra.mxu0 0.0
  %125 = vmatpush.msra.mxu0 %v30
  %126 = vmatpush.msra.mxu0 %v29
  %127 = vmatpush.msra.mxu0 %v28
  %128 = vmatpush.msra.mxu0 %v27
  %129 = vmatpush.msra.mxu0 %v26
  %130 = vmatpush.msra.mxu0 %v25
  %131 = vmatpush.msra.mxu0 %v24
  %132 = vmatpush.msra.mxu0 %v23
  %133 = vmatmul.f32.gmra.mxu0 %v51
  %v134 = vpop.f32.mrf.mxu0
  %v135 = vadd.f32 %v115, %v134
  %136 = vdwg.mxu0
  %v138 = vsel %vm49, %v96, 0
  %140 = vmatpush.msra.mxu0 0.0
  %141 = vmatpush.msra.mxu0 0.0
  %142 = vmatpush.msra.mxu0 0.0
  %143 = vmatpush.msra.mxu0 0.0
  %144 = vmatpush.msra.mxu0 0.0
  %145 = vmatpush.msra.mxu0 0.0
  %146 = vmatpush.msra.mxu0 0.0
  %147 = vmatpush.msra.mxu0 0.0
  %148 = vmatpush.msra.mxu0 %v39
  %149 = vmatpush.msra.mxu0 %v38
  %150 = vmatpush.msra.mxu0 %v37
  %151 = vmatpush.msra.mxu0 %v36
  %152 = vmatpush.msra.mxu0 %v35
  %153 = vmatpush.msra.mxu0 %v34
  %154 = vmatpush.msra.mxu0 %v33
  %155 = vmatpush.msra.mxu0 %v32
  %156 = vmatmul.f32.gmra.mxu0 %v138
  %v157 = vpop.f32.mrf.mxu0
  %v158 = vadd.f32 0.0, %v157
  %159 = vdwg.mxu0
  %v161 = vsel %vm49, %v135, 0
  %163 = vmatpush.msra.mxu0 0.0
  %164 = vmatpush.msra.mxu0 0.0
  %165 = vmatpush.msra.mxu0 0.0
  %166 = vmatpush.msra.mxu0 0.0
  %167 = vmatpush.msra.mxu0 0.0
  %168 = vmatpush.msra.mxu0 0.0
  %169 = vmatpush.msra.mxu0 0.0
  %170 = vmatpush.msra.mxu0 0.0
  %171 = vmatpush.msra.mxu0 %v48
  %172 = vmatpush.msra.mxu0 %v47
  %173 = vmatpush.msra.mxu0 %v46
  %174 = vmatpush.msra.mxu0 %v45
  %175 = vmatpush.msra.mxu0 %v44
  %176 = vmatpush.msra.mxu0 %v43
  %177 = vmatpush.msra.mxu0 %v42
  %178 = vmatpush.msra.mxu0 %v41
  %179 = vmatmul.f32.gmra.mxu0 %v161
  %v180 = vpop.f32.mrf.mxu0
  %v181 = vadd.f32 0.0, %v180
  %182 = vdwg.mxu0
  %v183 = vsub.f32 %v158, %v181
  %184 = vmatpush.msra.mxu0 0.0
  %185 = vmatpush.msra.mxu0 0.0
  %186 = vmatpush.msra.mxu0 0.0
  %187 = vmatpush.msra.mxu0 0.0
  %188 = vmatpush.msra.mxu0 0.0
  %189 = vmatpush.msra.mxu0 0.0
  %190 = vmatpush.msra.mxu0 0.0
  %191 = vmatpush.msra.mxu0 0.0
  %192 = vmatpush.msra.mxu0 %v39
  %193 = vmatpush.msra.mxu0 %v38
  %194 = vmatpush.msra.mxu0 %v37
  %195 = vmatpush.msra.mxu0 %v36
  %196 = vmatpush.msra.mxu0 %v35
  %197 = vmatpush.msra.mxu0 %v34
  %198 = vmatpush.msra.mxu0 %v33
  %199 = vmatpush.msra.mxu0 %v32
  %200 = vmatmul.f32.gmra.mxu0 %v161
  %v201 = vpop.f32.mrf.mxu0
  %v202 = vadd.f32 0.0, %v201
  %203 = vdwg.mxu0
  %204 = vmatpush.msra.mxu0 0.0
  %205 = vmatpush.msra.mxu0 0.0
  %206 = vmatpush.msra.mxu0 0.0
  %207 = vmatpush.msra.mxu0 0.0
  %208 = vmatpush.msra.mxu0 0.0
  %209 = vmatpush.msra.mxu0 0.0
  %210 = vmatpush.msra.mxu0 0.0
  %211 = vmatpush.msra.mxu0 0.0
  %212 = vmatpush.msra.mxu0 %v48
  %213 = vmatpush.msra.mxu0 %v47
  %214 = vmatpush.msra.mxu0 %v46
  %215 = vmatpush.msra.mxu0 %v45
  %216 = vmatpush.msra.mxu0 %v44
  %217 = vmatpush.msra.mxu0 %v43
  %218 = vmatpush.msra.mxu0 %v42
  %219 = vmatpush.msra.mxu0 %v41
  %220 = vmatmul.f32.gmra.mxu0 %v138
  %v221 = vpop.f32.mrf.mxu0
  %v222 = vadd.f32 %v202, %v221
  %223 = vdwg.mxu0
  %224 = vst.msk [vmem:[%s2] sm:$0xff] %vm49, %v183
  %s225 = scalar_lea.vmem %s2, 8
  %226 = vst.msk [vmem:[%s225] sm:$0xff] %vm49, %v222
  // Predicated region
  $region10: #{block_fft_forward.1} parent=0 // pred_check
    _
  $region11: #{block_fft_forward.1} parent=0 // pred_check_branch
    %228 = sbr.rel (0) target = $region13
  $region12: #{block_fft_forward.1} parent=0 // pred_region
    _
  $region13: #{block_fft_forward.1} parent=0 // pred_fallthru
    _
  // Predicated region
  $region14: #{block_fft_forward.1} parent=0 // pred_check
    _
  $region15: #{block_fft_forward.1} parent=0 // pred_check_branch
    %230 = sbr.rel (0) target = $region17
  $region16: #{block_fft_forward.1} parent=0 // pred_region
    _
  $region17: #{block_fft_forward.1} parent=0 // pred_fallthru
    _

</llo_original>
